<compile_context>
chip_gen: v7x
topology: tpu7x:2x2x1
jax: 0.10.0
libtpu: 0.0.40
codegen_flags: <defaults>
</compile_context>

<pallas_src>
import functools

import jax
import jax.numpy as jnp
from jax.experimental import pallas as pl
from jax.experimental.pallas import tpu as pltpu

_LANES = 128
_IN_ROWS = 8    # [vx, vy, vz, wx, wy, wz, b, dt]
_OUT_ROWS = 6   # [vx', vy', vz', wx', wy', wz']


def _phytune_kernel(params_ref, in_ref, out_ref):
    # params (SMEM f32[8]): [p1, p2, p3x, p3y, p3z, p4, p5, p6(=r)]
    p1 = params_ref[0]
    p2 = params_ref[1]
    p3x = params_ref[2]
    p3y = params_ref[3]
    p3z = params_ref[4]
    p4 = params_ref[5]
    p5 = params_ref[6]
    r = params_ref[7]

    # hoisted scalar coefficients (scalar unit; free)
    c_al = p4 * (1.0 + p5)
    c15_over_r = 1.5 / r
    gz = p3z - 9.81

    # dense (rows, 128) component planes
    vx = in_ref[0]
    vy = in_ref[1]
    vz = in_ref[2]
    wx = in_ref[3]
    wy = in_ref[4]
    wz = in_ref[5]
    b = in_ref[6]
    dt = in_ref[7]

    # _compute_alpha: abs(vz) * rsqrt(.) -> EUP slot, no vector divide
    d2 = (vx - wy * r) ** 2 + (vy + wx * r) ** 2 + 1e-6
    al = c_al * jnp.abs(vz) * jax.lax.rsqrt(d2)
    al = jnp.where(al > 0.4, 0.4, al)

    # _predict_bounce: A, B, C, D are diagonal / antisymmetric 3x3 matrices,
    # so the batched matmuls are written out componentwise (exact).
    one_m_al = 1.0 - al
    al_r = al * r
    al15_over_r = c15_over_r * al     # 1.5 * al / r
    one_m_al15 = 1.0 - 1.5 * al

    ve_x = one_m_al * vx + al_r * wy
    ve_y = one_m_al * vy - al_r * wx
    ve_z = -p5 * vz                    # -k_v * v_z
    we_x = one_m_al15 * wx - al15_over_r * vy
    we_y = one_m_al15 * wy + al15_over_r * vx
    # we_z = wz (unchanged)

    # bounce condition: b < 0 and v_z < 0
    cond = jnp.logical_and(b < 0.0, vz < 0.0)
    vx = jnp.where(cond, ve_x, vx)
    vy = jnp.where(cond, ve_y, vy)
    vz = jnp.where(cond, ve_z, vz)
    wx = jnp.where(cond, we_x, wx)
    wy = jnp.where(cond, we_y, wy)
    # wz stays wz

    # aerodynamic acceleration
    norm_v = jnp.sqrt(vx * vx + vy * vy + vz * vz)
    # cross(w, v)
    cx = wy * vz - wz * vy
    cy = wz * vx - wx * vz
    cz = wx * vy - wy * vx

    acc_x = -p1 * norm_v * vx + p2 * cx + p3x
    acc_y = -p1 * norm_v * vy + p2 * cy + p3y
    acc_z = -p1 * norm_v * vz + p2 * cz + gz

    # dense plane-wise stores (no sublane concatenation)
    out_ref[0] = vx + acc_x * dt
    out_ref[1] = vy + acc_y * dt
    out_ref[2] = vz + acc_z * dt
    out_ref[3] = wx
    out_ref[4] = wy
    out_ref[5] = wz


def _round_up(x, m):
    return ((x + m - 1) // m) * m


def _pick_block_rows(total_rows, block_rows):
    """Largest row tile <= block_rows that is a multiple of 8 and divides total_rows."""
    br = min(block_rows, total_rows)
    br = max(8, (br // 8) * 8)
    while br > 8 and total_rows % br != 0:
        br -= 8
    if total_rows % br != 0:
        br = total_rows          # single block; full-extent dim is always legal
    return br


@functools.partial(jax.jit, static_argnames=("block_rows",))
def phytune_forward_packed(params, slab, *, block_rows=64):
    """Steady-state entry point.

    params: f32[8] = [p1, p2, p3x, p3y, p3z, p4, p5, p6]
    slab:   f32[8, R, 128], planes [vx, vy, vz, wx, wy, wz, b, dt]
    returns f32[6, R, 128], planes [vx', vy', vz', wx', wy', wz']
    """
    rows, R, lanes = slab.shape
    assert rows == _IN_ROWS and lanes == _LANES
    rt = _pick_block_rows(R, block_rows)
    grid = (R // rt,)

    in_spec = pl.BlockSpec((_IN_ROWS, rt, _LANES), lambda i: (0, i, 0))
    out_spec = pl.BlockSpec((_OUT_ROWS, rt, _LANES), lambda i: (0, i, 0))

    return pl.pallas_call(
        _phytune_kernel,
        out_shape=jax.ShapeDtypeStruct((_OUT_ROWS, R, _LANES), jnp.float32),
        grid=grid,
        in_specs=[
            pl.BlockSpec(memory_space=pltpu.MemorySpace.SMEM),  # params
            in_spec,                                            # packed state slab
        ],
        out_specs=out_spec,
        compiler_params=pltpu.CompilerParams(
            dimension_semantics=("parallel",)),
    )(jnp.asarray(params, jnp.float32), slab)


def phytune_forward(params, b, v, w, dt, *, block_rows=64):
    """Convenience wrapper matching the torch forward(b, v, w, dt) layout.

    params: f32[8]; b: [B,1] (or [B] / [B,1,1]); v, w: [B,3] (or [B,1,3]);
    dt: scalar or one value per ball.  Returns (v_new, w_new) in v/w's shape.
    """
    v = jnp.asarray(v, jnp.float32)
    w = jnp.asarray(w, jnp.float32)
    orig_v_shape, orig_w_shape = v.shape, w.shape
    v2 = v.reshape(-1, 3)
    w2 = w.reshape(-1, 3)
    B = v2.shape[0]

    b1 = jnp.asarray(b, jnp.float32).reshape(-1)
    assert b1.shape[0] in (1, B), "b must be a scalar or have one value per ball"
    if b1.shape[0] == 1:
        b1 = jnp.broadcast_to(b1[:1], (B,))

    dt1 = jnp.asarray(dt, jnp.float32).reshape(-1)
    assert dt1.shape[0] in (1, B), "dt must be a scalar or have one value per ball"
    if dt1.shape[0] == 1:
        dt1 = jnp.broadcast_to(dt1[:1], (B,))

    # pack into the component-plane slab: (8, B) -> pad -> (8, R, 128)
    rows = jnp.stack([v2[:, 0], v2[:, 1], v2[:, 2],
                      w2[:, 0], w2[:, 1], w2[:, 2], b1, dt1], axis=0)

    r_needed = pl.cdiv(B, _LANES)
    rt = max(8, min(block_rows, _round_up(r_needed, 8)))
    rt = (rt // 8) * 8
    rp = _round_up(r_needed, rt)
    bp = rp * _LANES

    rows = jnp.pad(rows, ((0, 0), (0, bp - B)))
    slab = rows.reshape(_IN_ROWS, rp, _LANES)

    out = phytune_forward_packed(params, slab, block_rows=block_rows)
    out = out.reshape(_OUT_ROWS, bp)[:, :B]            # (6, B)
    v_new = out[0:3].T.reshape(orig_v_shape)
    w_new = out[3:6].T.reshape(orig_w_shape)
    return v_new, w_new


def phytune_reference(params, b, v, w, dt):
    """Pure-JAX reference mirroring the torch code (diag_embed / matmul path)."""
    p1, p2 = params[0], params[1]
    p3 = params[2:5].reshape(1, 3)
    p4, p5, r = params[5], params[6], params[7]

    v = jnp.asarray(v, jnp.float32)
    w = jnp.asarray(w, jnp.float32)
    b = jnp.asarray(b, jnp.float32)
    dt = jnp.asarray(dt, jnp.float32)

    vx, vy, vz = v[..., 0:1], v[..., 1:2], v[..., 2:3]
    wx, wy = w[..., 0:1], w[..., 1:2]

    al = p4 * (1.0 + p5) * jnp.abs(vz) / jnp.sqrt(
        (vx - wy * r) ** 2 + (vy + wx * r) ** 2 + 1e-6)
    al = jnp.where(al > 0.4, 0.4, al)

    zeros = jnp.zeros_like(al)
    ones = jnp.ones_like(al)
    A = jax.vmap(jnp.diag)(jnp.concatenate([1 - al, 1 - al, -p5 * ones], -1))
    Bm = jnp.stack([
        jnp.concatenate([zeros, al * r, zeros], -1),
        jnp.concatenate([-al * r, zeros, zeros], -1),
        jnp.concatenate([zeros, zeros, zeros], -1)], axis=1)
    C = jnp.stack([
        jnp.concatenate([zeros, -1.5 * al / r, zeros], -1),
        jnp.concatenate([1.5 * al / r, zeros, zeros], -1),
        jnp.concatenate([zeros, zeros, zeros], -1)], axis=1)
    D = jax.vmap(jnp.diag)(jnp.concatenate([1 - 1.5 * al, 1 - 1.5 * al, ones], -1))

    v_e = jnp.einsum('bij,bj->bi', A, v) + jnp.einsum('bij,bj->bi', Bm, w)
    w_e = jnp.einsum('bij,bj->bi', C, v) + jnp.einsum('bij,bj->bi', D, w)

    cond = jnp.logical_and(b < 0.0, vz < 0.0)
    v2 = jnp.where(cond, v_e, v)
    w2 = jnp.where(cond, w_e, w)

    norm_v = jnp.linalg.norm(v2, axis=-1, keepdims=True)
    cross_vw = jnp.cross(w2, v2)
    acc = -p1 * norm_v * v2 + p2 * cross_vw + p3 + jnp.array(
        [0.0, 0.0, -9.81], jnp.float32).reshape(1, 3)
    return v2 + acc * dt, w2


if __name__ == "__main__":
    # deterministic parameter init, matching PhyTune._init_gt():
    # [param1, param2, param3(x,y,z), param4, param5, param6]
    params = jnp.array([0.1196, 0.015, 0.0, 0.0, 0.0, 0.22, 0.79, 0.02], jnp.float32)

    # --- small case, [B,3] convention ---
    key = jax.random.PRNGKey(0)
    kb, kv, kw = jax.random.split(key, 3)
    B = 8
    v = jax.random.normal(kv, (B, 3), jnp.float32) * 3.0
    w = jax.random.normal(kw, (B, 3), jnp.float32) * 5.0
    b = jax.random.normal(kb, (B, 1), jnp.float32) * 0.1   # mixed sign -> some bounces
    dt = jnp.full((B, 1), 0.01, jnp.float32)

    v_new, w_new = phytune_forward(params, b, v, w, dt)
    jax.block_until_ready((v_new, w_new))

    v_ref, w_ref = phytune_reference(params, b, v, w, dt)
    assert jnp.allclose(v_new, v_ref, atol=1e-5, rtol=1e-5), (v_new, v_ref)
    assert jnp.allclose(w_new, w_ref, atol=1e-5, rtol=1e-5), (w_new, w_ref)

    # --- larger ragged case exercising multi-block grid + scalar dt ---
    B2 = 2000
    kb2, kv2, kw2 = jax.random.split(jax.random.PRNGKey(1), 3)
    v2 = jax.random.normal(kv2, (B2, 3), jnp.float32) * 3.0
    w2 = jax.random.normal(kw2, (B2, 3), jnp.float32) * 5.0
    b2 = jax.random.normal(kb2, (B2, 1), jnp.float32) * 0.1
    dt2 = jnp.float32(0.01)

    v_new2, w_new2 = phytune_forward(params, b2, v2, w2, dt2, block_rows=8)
    jax.block_until_ready((v_new2, w_new2))
    v_ref2, w_ref2 = phytune_reference(params, b2, v2, w2, dt2)
    assert jnp.allclose(v_new2, v_ref2, atol=1e-4, rtol=1e-4)
    assert jnp.allclose(w_new2, w_ref2, atol=1e-5, rtol=1e-5)

    print("KERNEL_OK")
</pallas_src>

<mosaic_0001>
module attributes {stable_mosaic.version = 11 : i64} {
  func.func @_phytune_kernel(%arg0: i32, %arg1: memref<8xf32, #tpu.memory_space<smem>>, %arg2: memref<8x8x128xf32, #tpu.memory_space<vmem>>, %arg3: memref<6x8x128xf32, #tpu.memory_space<vmem>>) attributes {dimension_semantics = [#tpu.dimension_semantics<parallel>], iteration_bounds = array<i64: 1>, scalar_prefetch = 0 : i64, scratch_operands = 0 : i64, tpu.core_type = #tpu.core_type<tc>, window_params = [{transform_indices = @transform_0, window_bounds = array<i64: 8>}, {transform_indices = @transform_1, window_bounds = array<i64: 8, 8, 128>}, {transform_indices = @transform_2, window_bounds = array<i64: 6, 8, 128>}]} {
    %c0 = arith.constant 0 : index
    %0 = memref.load %arg1[%c0] : memref<8xf32, #tpu.memory_space<smem>>
    %c1 = arith.constant 1 : index
    %1 = memref.load %arg1[%c1] : memref<8xf32, #tpu.memory_space<smem>>
    %c2 = arith.constant 2 : index
    %2 = memref.load %arg1[%c2] : memref<8xf32, #tpu.memory_space<smem>>
    %c3 = arith.constant 3 : index
    %3 = memref.load %arg1[%c3] : memref<8xf32, #tpu.memory_space<smem>>
    %c4 = arith.constant 4 : index
    %4 = memref.load %arg1[%c4] : memref<8xf32, #tpu.memory_space<smem>>
    %c5 = arith.constant 5 : index
    %5 = memref.load %arg1[%c5] : memref<8xf32, #tpu.memory_space<smem>>
    %c6 = arith.constant 6 : index
    %6 = memref.load %arg1[%c6] : memref<8xf32, #tpu.memory_space<smem>>
    %c7 = arith.constant 7 : index
    %7 = memref.load %arg1[%c7] : memref<8xf32, #tpu.memory_space<smem>>
    %cst = arith.constant 1.000000e+00 : f32
    %8 = arith.addf %cst, %6 : f32
    %9 = arith.mulf %5, %8 : f32
    %cst_0 = arith.constant 1.500000e+00 : f32
    %10 = arith.divf %cst_0, %7 : f32
    %cst_1 = arith.constant 9.810000e+00 : f32
    %11 = arith.subf %4, %cst_1 : f32
    %c0_2 = arith.constant 0 : index
    %c0_3 = arith.constant 0 : index
    %c0_4 = arith.constant 0 : index
    %12 = vector.load %arg2[%c0_2, %c0_3, %c0_4] : memref<8x8x128xf32, #tpu.memory_space<vmem>>, vector<1x8x128xf32>
    %13 = vector.shape_cast %12 : vector<1x8x128xf32> to vector<8x128xf32>
    %c1_5 = arith.constant 1 : index
    %c0_6 = arith.constant 0 : index
    %c0_7 = arith.constant 0 : index
    %14 = vector.load %arg2[%c1_5, %c0_6, %c0_7] : memref<8x8x128xf32, #tpu.memory_space<vmem>>, vector<1x8x128xf32>
    %15 = vector.shape_cast %14 : vector<1x8x128xf32> to vector<8x128xf32>
    %c2_8 = arith.constant 2 : index
    %c0_9 = arith.constant 0 : index
    %c0_10 = arith.constant 0 : index
    %16 = vector.load %arg2[%c2_8, %c0_9, %c0_10] : memref<8x8x128xf32, #tpu.memory_space<vmem>>, vector<1x8x128xf32>
    %17 = vector.shape_cast %16 : vector<1x8x128xf32> to vector<8x128xf32>
    %c3_11 = arith.constant 3 : index
    %c0_12 = arith.constant 0 : index
    %c0_13 = arith.constant 0 : index
    %18 = vector.load %arg2[%c3_11, %c0_12, %c0_13] : memref<8x8x128xf32, #tpu.memory_space<vmem>>, vector<1x8x128xf32>
    %19 = vector.shape_cast %18 : vector<1x8x128xf32> to vector<8x128xf32>
    %c4_14 = arith.constant 4 : index
    %c0_15 = arith.constant 0 : index
    %c0_16 = arith.constant 0 : index
    %20 = vector.load %arg2[%c4_14, %c0_15, %c0_16] : memref<8x8x128xf32, #tpu.memory_space<vmem>>, vector<1x8x128xf32>
    %21 = vector.shape_cast %20 : vector<1x8x128xf32> to vector<8x128xf32>
    %c5_17 = arith.constant 5 : index
    %c0_18 = arith.constant 0 : index
    %c0_19 = arith.constant 0 : index
    %22 = vector.load %arg2[%c5_17, %c0_18, %c0_19] : memref<8x8x128xf32, #tpu.memory_space<vmem>>, vector<1x8x128xf32>
    %23 = vector.shape_cast %22 : vector<1x8x128xf32> to vector<8x128xf32>
    %c6_20 = arith.constant 6 : index
    %c0_21 = arith.constant 0 : index
    %c0_22 = arith.constant 0 : index
    %24 = vector.load %arg2[%c6_20, %c0_21, %c0_22] : memref<8x8x128xf32, #tpu.memory_space<vmem>>, vector<1x8x128xf32>
    %25 = vector.shape_cast %24 : vector<1x8x128xf32> to vector<8x128xf32>
    %c7_23 = arith.constant 7 : index
    %c0_24 = arith.constant 0 : index
    %c0_25 = arith.constant 0 : index
    %26 = vector.load %arg2[%c7_23, %c0_24, %c0_25] : memref<8x8x128xf32, #tpu.memory_space<vmem>>, vector<1x8x128xf32>
    %27 = vector.shape_cast %26 : vector<1x8x128xf32> to vector<8x128xf32>
    %28 = vector.broadcast %7 : f32 to vector<8x128xf32>
    %29 = arith.mulf %21, %28 : vector<8x128xf32>
    %30 = arith.subf %13, %29 : vector<8x128xf32>
    %31 = arith.mulf %30, %30 : vector<8x128xf32>
    %32 = vector.broadcast %7 : f32 to vector<8x128xf32>
    %33 = arith.mulf %19, %32 : vector<8x128xf32>
    %34 = arith.addf %15, %33 : vector<8x128xf32>
    %35 = arith.mulf %34, %34 : vector<8x128xf32>
    %36 = arith.addf %31, %35 : vector<8x128xf32>
    %cst_26 = arith.constant 9.99999997E-7 : f32
    %37 = vector.broadcast %cst_26 : f32 to vector<8x128xf32>
    %38 = arith.addf %36, %37 : vector<8x128xf32>
    %39 = math.absf %17 : vector<8x128xf32>
    %40 = vector.broadcast %9 : f32 to vector<8x128xf32>
    %41 = arith.mulf %40, %39 : vector<8x128xf32>
    %42 = math.rsqrt %38 : vector<8x128xf32>
    %43 = arith.mulf %41, %42 : vector<8x128xf32>
    %cst_27 = arith.constant 4.000000e-01 : f32
    %44 = vector.broadcast %cst_27 : f32 to vector<8x128xf32>
    %45 = arith.cmpf ogt, %43, %44 : vector<8x128xf32>
    %cst_28 = arith.constant 4.000000e-01 : f32
    %46 = vector.broadcast %cst_28 : f32 to vector<8x128xf32>
    %47 = arith.select %45, %46, %43 : vector<8x128xi1>, vector<8x128xf32>
    %cst_29 = arith.constant 1.000000e+00 : f32
    %48 = vector.broadcast %cst_29 : f32 to vector<8x128xf32>
    %49 = arith.subf %48, %47 : vector<8x128xf32>
    %50 = vector.broadcast %7 : f32 to vector<8x128xf32>
    %51 = arith.mulf %47, %50 : vector<8x128xf32>
    %52 = vector.broadcast %10 : f32 to vector<8x128xf32>
    %53 = arith.mulf %52, %47 : vector<8x128xf32>
    %cst_30 = arith.constant 1.500000e+00 : f32
    %54 = vector.broadcast %cst_30 : f32 to vector<8x128xf32>
    %55 = arith.mulf %54, %47 : vector<8x128xf32>
    %cst_31 = arith.constant 1.000000e+00 : f32
    %56 = vector.broadcast %cst_31 : f32 to vector<8x128xf32>
    %57 = arith.subf %56, %55 : vector<8x128xf32>
    %58 = arith.mulf %49, %13 : vector<8x128xf32>
    %59 = arith.mulf %51, %21 : vector<8x128xf32>
    %60 = arith.addf %58, %59 : vector<8x128xf32>
    %61 = arith.mulf %49, %15 : vector<8x128xf32>
    %62 = arith.mulf %51, %19 : vector<8x128xf32>
    %63 = arith.subf %61, %62 : vector<8x128xf32>
    %cst_32 = arith.constant 0.000000e+00 : f32
    %64 = arith.subf %cst_32, %6 : f32
    %65 = vector.broadcast %64 : f32 to vector<8x128xf32>
    %66 = arith.mulf %65, %17 : vector<8x128xf32>
    %67 = arith.mulf %57, %19 : vector<8x128xf32>
    %68 = arith.mulf %53, %15 : vector<8x128xf32>
    %69 = arith.subf %67, %68 : vector<8x128xf32>
    %70 = arith.mulf %57, %21 : vector<8x128xf32>
    %71 = arith.mulf %53, %13 : vector<8x128xf32>
    %72 = arith.addf %70, %71 : vector<8x128xf32>
    %cst_33 = arith.constant 0.000000e+00 : f32
    %73 = vector.broadcast %cst_33 : f32 to vector<8x128xf32>
    %74 = arith.cmpf olt, %25, %73 : vector<8x128xf32>
    %cst_34 = arith.constant 0.000000e+00 : f32
    %75 = vector.broadcast %cst_34 : f32 to vector<8x128xf32>
    %76 = arith.cmpf olt, %17, %75 : vector<8x128xf32>
    %77 = arith.andi %74, %76 : vector<8x128xi1>
    %78 = arith.select %77, %60, %13 : vector<8x128xi1>, vector<8x128xf32>
    %79 = arith.select %77, %63, %15 : vector<8x128xi1>, vector<8x128xf32>
    %80 = arith.select %77, %66, %17 : vector<8x128xi1>, vector<8x128xf32>
    %81 = arith.select %77, %69, %19 : vector<8x128xi1>, vector<8x128xf32>
    %82 = arith.select %77, %72, %21 : vector<8x128xi1>, vector<8x128xf32>
    %83 = arith.mulf %78, %78 : vector<8x128xf32>
    %84 = arith.mulf %79, %79 : vector<8x128xf32>
    %85 = arith.addf %83, %84 : vector<8x128xf32>
    %86 = arith.mulf %80, %80 : vector<8x128xf32>
    %87 = arith.addf %85, %86 : vector<8x128xf32>
    %88 = math.sqrt %87 : vector<8x128xf32>
    %89 = arith.mulf %82, %80 : vector<8x128xf32>
    %90 = arith.mulf %23, %79 : vector<8x128xf32>
    %91 = arith.subf %89, %90 : vector<8x128xf32>
    %92 = arith.mulf %23, %78 : vector<8x128xf32>
    %93 = arith.mulf %81, %80 : vector<8x128xf32>
    %94 = arith.subf %92, %93 : vector<8x128xf32>
    %95 = arith.mulf %81, %79 : vector<8x128xf32>
    %96 = arith.mulf %82, %78 : vector<8x128xf32>
    %97 = arith.subf %95, %96 : vector<8x128xf32>
    %cst_35 = arith.constant 0.000000e+00 : f32
    %98 = arith.subf %cst_35, %0 : f32
    %99 = vector.broadcast %98 : f32 to vector<8x128xf32>
    %100 = arith.mulf %99, %88 : vector<8x128xf32>
    %101 = arith.mulf %100, %78 : vector<8x128xf32>
    %102 = vector.broadcast %1 : f32 to vector<8x128xf32>
    %103 = arith.mulf %102, %91 : vector<8x128xf32>
    %104 = arith.addf %101, %103 : vector<8x128xf32>
    %105 = vector.broadcast %2 : f32 to vector<8x128xf32>
    %106 = arith.addf %104, %105 : vector<8x128xf32>
    %cst_36 = arith.constant 0.000000e+00 : f32
    %107 = arith.subf %cst_36, %0 : f32
    %108 = vector.broadcast %107 : f32 to vector<8x128xf32>
    %109 = arith.mulf %108, %88 : vector<8x128xf32>
    %110 = arith.mulf %109, %79 : vector<8x128xf32>
    %111 = vector.broadcast %1 : f32 to vector<8x128xf32>
    %112 = arith.mulf %111, %94 : vector<8x128xf32>
    %113 = arith.addf %110, %112 : vector<8x128xf32>
    %114 = vector.broadcast %3 : f32 to vector<8x128xf32>
    %115 = arith.addf %113, %114 : vector<8x128xf32>
    %cst_37 = arith.constant 0.000000e+00 : f32
    %116 = arith.subf %cst_37, %0 : f32
    %117 = vector.broadcast %116 : f32 to vector<8x128xf32>
    %118 = arith.mulf %117, %88 : vector<8x128xf32>
    %119 = arith.mulf %118, %80 : vector<8x128xf32>
    %120 = vector.broadcast %1 : f32 to vector<8x128xf32>
    %121 = arith.mulf %120, %97 : vector<8x128xf32>
    %122 = arith.addf %119, %121 : vector<8x128xf32>
    %123 = vector.broadcast %11 : f32 to vector<8x128xf32>
    %124 = arith.addf %122, %123 : vector<8x128xf32>
    %125 = arith.mulf %106, %27 : vector<8x128xf32>
    %126 = arith.addf %78, %125 : vector<8x128xf32>
    %c0_38 = arith.constant 0 : index
    %c0_39 = arith.constant 0 : index
    %c0_40 = arith.constant 0 : index
    %127 = vector.load %arg3[%c0_38, %c0_39, %c0_40] : memref<6x8x128xf32, #tpu.memory_space<vmem>>, vector<1x8x128xf32>
    %128 = vector.shape_cast %127 : vector<1x8x128xf32> to vector<8x128xf32>
    %129 = vector.shape_cast %126 : vector<8x128xf32> to vector<1x8x128xf32>
    tpu.vector_store %arg3[%c0_38, %c0_39, %c0_40], %129 {strides = array<i32>} : memref<6x8x128xf32, #tpu.memory_space<vmem>>, vector<1x8x128xf32>,
    %130 = arith.mulf %115, %27 : vector<8x128xf32>
    %131 = arith.addf %79, %130 : vector<8x128xf32>
    %c1_41 = arith.constant 1 : index
    %c0_42 = arith.constant 0 : index
    %c0_43 = arith.constant 0 : index
    %132 = vector.load %arg3[%c1_41, %c0_42, %c0_43] : memref<6x8x128xf32, #tpu.memory_space<vmem>>, vector<1x8x128xf32>
    %133 = vector.shape_cast %132 : vector<1x8x128xf32> to vector<8x128xf32>
    %134 = vector.shape_cast %131 : vector<8x128xf32> to vector<1x8x128xf32>
    tpu.vector_store %arg3[%c1_41, %c0_42, %c0_43], %134 {strides = array<i32>} : memref<6x8x128xf32, #tpu.memory_space<vmem>>, vector<1x8x128xf32>,
    %135 = arith.mulf %124, %27 : vector<8x128xf32>
    %136 = arith.addf %80, %135 : vector<8x128xf32>
    %c2_44 = arith.constant 2 : index
    %c0_45 = arith.constant 0 : index
    %c0_46 = arith.constant 0 : index
    %137 = vector.load %arg3[%c2_44, %c0_45, %c0_46] : memref<6x8x128xf32, #tpu.memory_space<vmem>>, vector<1x8x128xf32>
    %138 = vector.shape_cast %137 : vector<1x8x128xf32> to vector<8x128xf32>
    %139 = vector.shape_cast %136 : vector<8x128xf32> to vector<1x8x128xf32>
    tpu.vector_store %arg3[%c2_44, %c0_45, %c0_46], %139 {strides = array<i32>} : memref<6x8x128xf32, #tpu.memory_space<vmem>>, vector<1x8x128xf32>,
    %c3_47 = arith.constant 3 : index
    %c0_48 = arith.constant 0 : index
    %c0_49 = arith.constant 0 : index
    %140 = vector.load %arg3[%c3_47, %c0_48, %c0_49] : memref<6x8x128xf32, #tpu.memory_space<vmem>>, vector<1x8x128xf32>
    %141 = vector.shape_cast %140 : vector<1x8x128xf32> to vector<8x128xf32>
    %142 = vector.shape_cast %81 : vector<8x128xf32> to vector<1x8x128xf32>
    tpu.vector_store %arg3[%c3_47, %c0_48, %c0_49], %142 {strides = array<i32>} : memref<6x8x128xf32, #tpu.memory_space<vmem>>, vector<1x8x128xf32>,
    %c4_50 = arith.constant 4 : index
    %c0_51 = arith.constant 0 : index
    %c0_52 = arith.constant 0 : index
    %143 = vector.load %arg3[%c4_50, %c0_51, %c0_52] : memref<6x8x128xf32, #tpu.memory_space<vmem>>, vector<1x8x128xf32>
    %144 = vector.shape_cast %143 : vector<1x8x128xf32> to vector<8x128xf32>
    %145 = vector.shape_cast %82 : vector<8x128xf32> to vector<1x8x128xf32>
    tpu.vector_store %arg3[%c4_50, %c0_51, %c0_52], %145 {strides = array<i32>} : memref<6x8x128xf32, #tpu.memory_space<vmem>>, vector<1x8x128xf32>,
    %c5_53 = arith.constant 5 : index
    %c0_54 = arith.constant 0 : index
    %c0_55 = arith.constant 0 : index
    %146 = vector.load %arg3[%c5_53, %c0_54, %c0_55] : memref<6x8x128xf32, #tpu.memory_space<vmem>>, vector<1x8x128xf32>
    %147 = vector.shape_cast %146 : vector<1x8x128xf32> to vector<8x128xf32>
    %148 = vector.shape_cast %23 : vector<8x128xf32> to vector<1x8x128xf32>
    tpu.vector_store %arg3[%c5_53, %c0_54, %c0_55], %148 {strides = array<i32>} : memref<6x8x128xf32, #tpu.memory_space<vmem>>, vector<1x8x128xf32>,
    return
  }
  func.func @transform_0(%arg0: i32) -> i32 {
    %c0_i32 = arith.constant 0 : i32
    %c0_i32_0 = arith.constant 0 : i32
    return %c0_i32 : i32
  }
  func.func @transform_1(%arg0: i32) -> (i32, i32, i32) {
    %c0_i32 = arith.constant 0 : i32
    %c0_i32_0 = arith.constant 0 : i32
    %c0_i32_1 = arith.constant 0 : i32
    return %c0_i32, %arg0, %c0_i32_0 : i32, i32, i32
  }
  func.func @transform_2(%arg0: i32) -> (i32, i32, i32) {
    %c0_i32 = arith.constant 0 : i32
    %c0_i32_0 = arith.constant 0 : i32
    %c0_i32_1 = arith.constant 0 : i32
    return %c0_i32, %arg0, %c0_i32_0 : i32, i32, i32
  }
}

</mosaic_0001>

<llo_original>
// kernel: phytune_forward_packed.1
$region0: #{phytune_forward_packed.1}
  #allocation0 [shape = 'u32[]', space=smem, size = 0x4, offset = 0x4, fixed_abs, tag = 'smem constant byte address 0x4 - core index']
  #allocation1 [shape = 'u32[144,128]{1,0:T(1,128)}', space=vmem, size = 0x12000, scoped, tag = 'internal scratch']
  %s0 = inlined_call_operand.hbm [shape: f32[8], index: 0, kind: input, shape index: {}]
  %s1 = inlined_call_operand.hbm [shape: f32[8,8,128], index: 1, kind: input, shape index: {}]
  %s2 = inlined_call_operand.hbm [shape: f32[6,8,128], index: 2, kind: output, shape index: {}]
  %s3 = sld [smem:[#allocation0]]
  $region26: #{phytune_forward_packed.1} parent=0
    _
  %s5 = ssub.s32 1, %s3
  %s6 = scalar_select 0, %s5, %s3
  $region1: #{phytune_forward_packed.1} parent=0
    #allocation2 [shape = 'u8[512]{0}', space=smem, size = 0x200, scoped, tag = 'input window, operand 0, single buffered']
    #allocation3 [shape = 's32[1]{0}', space=sflag, size = 0x4, scoped, tag = 'scoped memory for phytune_forward_packed.1']
    #allocation4 [shape = 's32[1]{0}', space=sflag, size = 0x4, scoped, tag = 'scoped memory for phytune_forward_packed.1']
    #allocation5 [shape = 's32[1]{0}', space=sflag, size = 0x4, scoped, tag = 'scoped memory for phytune_forward_packed.1']
    #allocation6 [shape = 'u8[32768]{0}', space=vmem, size = 0x8000, scoped, tag = 'input window, operand 1, single buffered']
    #allocation7 [shape = 'u8[24576]{0}', space=vmem, size = 0x6000, scoped, tag = 'output window, operand 0, single buffered']
    %7 = vsyncpa [#allocation5], 0
    %8 = vsyncpa [#allocation3], 0
    %9 = vsyncpa [#allocation4], 0
    // Predicated region
    $region2: #{phytune_forward_packed.1} parent=1 // pred_check
      _
    $region3: #{phytune_forward_packed.1} parent=1 // pred_check_branch
      %11 = sbr.rel (0) target = $region5
    $region4: #{phytune_forward_packed.1} parent=1 // pred_region
      %s13 = ssub.s32 16, 16
      %14 = vsyncadd [#allocation5], %s13
      %17 = dma.hbm_to_smem %s0, 16, [#allocation2], [#allocation5]
    $region5: #{phytune_forward_packed.1} parent=1 // pred_fallthru
      _
    // Predicated region
    $region6: #{phytune_forward_packed.1} parent=1 // pred_check
      _
    $region7: #{phytune_forward_packed.1} parent=1 // pred_check_branch
      %19 = sbr.rel (0) target = $region9
    $region8: #{phytune_forward_packed.1} parent=1 // pred_region
      %s21 = ssub.s32 1024, 1024
      %22 = vsyncadd [#allocation3], %s21
      %s23 = sshll.u32 [#allocation6], 4
      %s24 = int_to_ptr.vmem [resolvable:$true] %s23
      %29 = dma.hbm_to_vmem [thread:$0]  %s1, 1024, %s24, [#allocation3], 128, 128, 8
    $region9: #{phytune_forward_packed.1} parent=1 // pred_fallthru
      _
    // Predicated region
    $region10: #{phytune_forward_packed.1} parent=1 // pred_check
      _
    $region11: #{phytune_forward_packed.1} parent=1 // pred_check_branch
      %31 = sbr.rel (0) target = $region13
    $region12: #{phytune_forward_packed.1} parent=1 // pred_region
      %32 = dma.done [#allocation5], 16
    $region13: #{phytune_forward_packed.1} parent=1 // pred_fallthru
      _
    // Predicated region
    $region14: #{phytune_forward_packed.1} parent=1 // pred_check
      _
    $region15: #{phytune_forward_packed.1} parent=1 // pred_check_branch
      %34 = sbr.rel (0) target = $region17
    $region16: #{phytune_forward_packed.1} parent=1 // pred_region
      %35 = dma.done [#allocation3], 1024
    $region17: #{phytune_forward_packed.1} parent=1 // pred_fallthru
      _
    %36 = sfence
    %s37 = sld [smem:[#allocation2]]
    %s38 = sld [smem:[#allocation2 + $0x1]]
    %s39 = sld [smem:[#allocation2 + $0x2]]
    %s40 = sld [smem:[#allocation2 + $0x3]]
    %s41 = sld [smem:[#allocation2 + $0x4]]
    %s42 = sld [smem:[#allocation2 + $0x5]]
    %s43 = sld [smem:[#allocation2 + $0x6]]
    %s44 = sld [smem:[#allocation2 + $0x7]]
    %s45 = sadd.f32 %s43, 1.0
    %s46 = smul.f32 %s42, %s45
    %v47 = vstv %s44
    %v48 = vrcp.pop %v47
    %s49 = vtos %v48
    %s50 = smul.f32 1.5, %s49
    %s51 = ssub.f32 %s41, 9.81
    %v52 = vld [vmem:[#allocation6] sm:$0xff]
    %s53 = scalar_lea.vmem [#allocation6], 8
    %v54 = vld [vmem:[%s53] sm:$0xff]
    %s55 = scalar_lea.vmem [#allocation6], 16
    %v56 = vld [vmem:[%s55] sm:$0xff]
    %s57 = scalar_lea.vmem [#allocation6], 24
    %v58 = vld [vmem:[%s57] sm:$0xff]
    %s59 = scalar_lea.vmem [#allocation6], 32
    %v60 = vld [vmem:[%s59] sm:$0xff]
    %s61 = scalar_lea.vmem [#allocation6], 40
    %v62 = vld [vmem:[%s61] sm:$0xff]
    %s63 = scalar_lea.vmem [#allocation6], 48
    %v64 = vld [vmem:[%s63] sm:$0xff]
    %s65 = scalar_lea.vmem [#allocation6], 56
    %v66 = vld [vmem:[%s65] sm:$0xff]
    %v67 = vstv %s44
    %v68 = vmul.f32 %v60, %v67
    %v69 = vsub.f32 %v52, %v68
    %v70 = vmul.f32 %v69, %v69
    %v71 = vmul.f32 %v58, %v67
    %v72 = vadd.f32 %v54, %v71
    %v73 = vmul.f32 %v72, %v72
    %v74 = vadd.f32 %v70, %v73
    %v75 = vadd.f32 %v74, 1e-06
    %v76 = vand.u32 2147483647, %v56
    %v77 = vstv %s46
    %v78 = vmul.f32 %v77, %v76
    %v79 = vrsqrt.pop %v75
    %v80 = vmul.f32 %v78, %v79
    %vm81 = vcmp.gt.f32.partialorder %v80, 0.4
    %v82 = vsel %vm81, 0.4, %v80
    %v83 = vsub.f32 1.0, %v82
    %v84 = vmul.f32 %v82, %v67
    %v85 = vstv %s50
    %v86 = vmul.f32 %v85, %v82
    %v87 = vmul.f32 %v82, 1.5
    %v88 = vsub.f32 1.0, %v87
    %v89 = vmul.f32 %v83, %v52
    %v90 = vmul.f32 %v84, %v60
    %v91 = vadd.f32 %v89, %v90
    %v92 = vmul.f32 %v83, %v54
    %v93 = vmul.f32 %v84, %v58
    %v94 = vsub.f32 %v92, %v93
    %s95 = ssub.f32 0.0, %s43
    %v96 = vstv %s95
    %v97 = vmul.f32 %v96, %v56
    %v98 = vmul.f32 %v88, %v58
    %v99 = vmul.f32 %v86, %v54
    %v100 = vsub.f32 %v98, %v99
    %v101 = vmul.f32 %v88, %v60
    %v102 = vmul.f32 %v86, %v52
    %v103 = vadd.f32 %v101, %v102
    %vm104 = vcmp.lt.f32.partialorder %v64, 0.0
    %vm105 = vcmp.lt.f32.partialorder %v56, 0.0
    %vm106 = vmand %vm104, %vm105
    %v107 = vsel %vm106, %v91, %v52
    %v108 = vsel %vm106, %v94, %v54
    %v109 = vsel %vm106, %v97, %v56
    %v110 = vsel %vm106, %v100, %v58
    %v111 = vsel %vm106, %v103, %v60
    %v112 = vmul.f32 %v107, %v107
    %v113 = vmul.f32 %v108, %v108
    %v114 = vadd.f32 %v112, %v113
    %v115 = vmul.f32 %v109, %v109
    %v116 = vadd.f32 %v114, %v115
    %v117 = vrsqrt.pop %v116
    %v118 = vmul.f32 %v116, %v117
    %vm119 = vcmp.eq.f32.partialorder %v116, inf
    %v120 = vsel %vm119, %v116, %v118
    %vm121 = vcmp.eq.f32.partialorder %v116, 0.0
    %v122 = vand.u32 %v116, 2147483648
    %v123 = vsel %vm121, %v122, %v120
    %v124 = vmul.f32 %v111, %v109
    %v125 = vmul.f32 %v62, %v108
    %v126 = vsub.f32 %v124, %v125
    %v127 = vmul.f32 %v62, %v107
    %v128 = vmul.f32 %v110, %v109
    %v129 = vsub.f32 %v127, %v128
    %v130 = vmul.f32 %v110, %v108
    %v131 = vmul.f32 %v111, %v107
    %v132 = vsub.f32 %v130, %v131
    %s133 = ssub.f32 0.0, %s37
    %v134 = vstv %s133
    %v135 = vmul.f32 %v134, %v123
    %v136 = vmul.f32 %v135, %v107
    %v137 = vstv %s38
    %v138 = vmul.f32 %v137, %v126
    %v139 = vadd.f32 %v136, %v138
    %v140 = vstv %s39
    %v141 = vadd.f32 %v139, %v140
    %v142 = vmul.f32 %v135, %v108
    %v143 = vmul.f32 %v137, %v129
    %v144 = vadd.f32 %v142, %v143
    %v145 = vstv %s40
    %v146 = vadd.f32 %v144, %v145
    %v147 = vmul.f32 %v135, %v109
    %v148 = vmul.f32 %v137, %v132
    %v149 = vadd.f32 %v147, %v148
    %v150 = vstv %s51
    %v151 = vadd.f32 %v149, %v150
    %v152 = vmul.f32 %v141, %v66
    %v153 = vadd.f32 %v107, %v152
    %154 = vst [vmem:[#allocation7] sm:$0xff] %v153
    %v155 = vmul.f32 %v146, %v66
    %v156 = vadd.f32 %v108, %v155
    %s157 = scalar_lea.vmem [#allocation7], 8
    %158 = vst [vmem:[%s157] sm:$0xff] %v156
    %v159 = vmul.f32 %v151, %v66
    %v160 = vadd.f32 %v109, %v159
    %s161 = scalar_lea.vmem [#allocation7], 16
    %162 = vst [vmem:[%s161] sm:$0xff] %v160
    %s163 = scalar_lea.vmem [#allocation7], 24
    %164 = vst [vmem:[%s163] sm:$0xff] %v110
    %s165 = scalar_lea.vmem [#allocation7], 32
    %166 = vst [vmem:[%s165] sm:$0xff] %v111
    %s167 = scalar_lea.vmem [#allocation7], 40
    %168 = vst [vmem:[%s167] sm:$0xff] %v62
    // Predicated region
    $region18: #{phytune_forward_packed.1} parent=1 // pred_check
      _
    $region19: #{phytune_forward_packed.1} parent=1 // pred_check_branch
      %170 = sbr.rel (0) target = $region21
    $region20: #{phytune_forward_packed.1} parent=1 // pred_region
      %s172 = ssub.s32 768, 768
      %173 = vsyncadd [#allocation4], %s172
      %s174 = sshll.u32 [#allocation7], 4
      %s175 = int_to_ptr.vmem [resolvable:$true] %s174
      %180 = dma.vmem_to_hbm [thread:$0]  %s175, 768, %s2, [#allocation4], 128, 128, 8
    $region21: #{phytune_forward_packed.1} parent=1 // pred_fallthru
      _
    // Predicated region
    $region22: #{phytune_forward_packed.1} parent=1 // pred_check
      _
    $region23: #{phytune_forward_packed.1} parent=1 // pred_check_branch
      %182 = sbr.rel (0) target = $region25
    $region24: #{phytune_forward_packed.1} parent=1 // pred_region
      %183 = dma.done [#allocation4], 768
    $region25: #{phytune_forward_packed.1} parent=1 // pred_fallthru
      _
    %184 = vsyncpa [#allocation3], 1
    %185 = vsyncpa [#allocation4], 1
    %186 = vsyncpa [#allocation5], 1

</llo_original>
